<compile_context>
chip_gen: v6e
topology: v6e:2x2x1
jax: 0.10.0
libtpu: 0.0.40
codegen_flags: <defaults>
</compile_context>

<pallas_src>
import functools

import jax
import jax.numpy as jnp
import numpy as np
from jax.experimental import pallas as pl
from jax.experimental.pallas import tpu as pltpu


def _ce_kernel(x_ref, lab_ref, loss_ref, *, num_classes, ignore_lb):
    # x_ref:    (1, C, TILE_S, TILE_L)  logits (any float dtype; math is f32)
    # lab_ref:  (1, TILE_S, TILE_L)     int32 labels
    # loss_ref: (1, TILE_S, TILE_L)     f32 per-pixel CE loss (0 for ignored)
    lab = lab_ref[0]                                   # (TILE_S, TILE_L)

    # Pass 1: class-wise running max (unrolled over tiny C -> pure VPU work,
    # no cross-lane XLU reduce, no (C, TILE) intermediate materialised).
    m = x_ref[0, 0].astype(jnp.float32)
    for c in range(1, num_classes):
        m = jnp.maximum(m, x_ref[0, c].astype(jnp.float32))

    # Pass 2: sum of exp (EUP) + gather the target-class logit via per-class
    # select instead of a dynamic gather / one-hot matrix.
    s = jnp.zeros_like(m)
    tgt = jnp.zeros_like(m)
    for c in range(num_classes):
        xc = x_ref[0, c].astype(jnp.float32)
        s = s + jnp.exp(xc - m)
        tgt = jnp.where(lab == c, xc, tgt)

    loss = (m + jnp.log(s)) - tgt                      # per-pixel CE
    loss = jnp.where(lab == ignore_lb, 0.0, loss)      # ignore_index -> 0
    loss_ref[0] = loss


def _pick_tiles(hw, max_lanes=1024, max_sublanes=8):
    """Choose (TILE_S, TILE_L) so blocks are lane/sublane aligned or full-dim."""
    lane = 0
    for cand in range(max_lanes, 0, -128):             # largest multiple of 128
        if hw % cand == 0:
            lane = cand
            break
    if lane == 0:
        # TODO(synk): for large irregular H*W it would be faster to pad the
        # pixel axis to a multiple of 1024 with ignore_lb pixels instead of
        # falling back to a full-extent lane block.
        lane = hw                                      # full-extent fallback
    rows = hw // lane
    sub = 0
    for cand in range(max_sublanes, 0, -8):            # largest multiple of 8
        if rows % cand == 0:
            sub = cand
            break
    if sub == 0:
        sub = rows                                     # full-extent fallback
    return sub, lane


def per_pixel_ce(logits, labels, *, ignore_lb=255,
                 max_lane_tile=1024, max_sublane_tile=8):
    """Per-pixel cross-entropy (reduction='none') via Pallas. Returns (P,) f32."""
    N, C, H, W = logits.shape
    HW = H * W
    tile_s, tile_l = _pick_tiles(HW, max_lane_tile, max_sublane_tile)
    rows = HW // tile_l

    # Free reshapes only — no HBM transpose, logits keep their NCHW strides.
    x = logits.reshape(N, C, rows, tile_l)
    lab = labels.reshape(N, rows, tile_l).astype(jnp.int32)

    out = pl.pallas_call(
        functools.partial(_ce_kernel, num_classes=C, ignore_lb=ignore_lb),
        out_shape=jax.ShapeDtypeStruct((N, rows, tile_l), jnp.float32),
        grid_spec=pltpu.PrefetchScalarGridSpec(
            num_scalar_prefetch=0,
            grid=(N, rows // tile_s),
            in_specs=[
                pl.BlockSpec((1, C, tile_s, tile_l), lambda n, t: (n, 0, t, 0)),
                pl.BlockSpec((1, tile_s, tile_l), lambda n, t: (n, t, 0)),
            ],
            out_specs=pl.BlockSpec((1, tile_s, tile_l), lambda n, t: (n, t, 0)),
        ),
        compiler_params=pltpu.CompilerParams(
            dimension_semantics=("parallel", "parallel")),
    )(x, lab)
    return out.reshape(-1)


def ohem_ce_loss(logits, labels, thresh, n_min, ignore_lb=255):
    """Matches OhemCELoss.forward semantics."""
    loss_flat = per_pixel_ce(logits, labels, ignore_lb=ignore_lb)
    thresh_val = -jnp.log(jnp.asarray(thresh, dtype=jnp.float32))

    # TODO(synk): the OHEM hard-example selection is data-dependent glue; done
    # in plain JAX.  top_k(n_min+1) replaces the full descending sort — it
    # yields both sorted_loss[n_min] and the top-n_min mean.
    topk, _ = jax.lax.top_k(loss_flat, n_min + 1)      # descending
    cond = topk[n_min] > thresh_val

    gt_mask = loss_flat > thresh_val
    cnt = jnp.sum(gt_mask)
    mean_gt = jnp.sum(jnp.where(gt_mask, loss_flat, 0.0)) / jnp.maximum(
        cnt, 1).astype(jnp.float32)
    mean_topk = jnp.mean(topk[:n_min])
    return jnp.where(cond, mean_gt, mean_topk)


def ohem_ce_loss_ref(logits, labels, thresh, n_min, ignore_lb=255):
    """Pure-JAX reference mirroring the PyTorch module."""
    N, C, H, W = logits.shape
    x = jnp.transpose(logits, (0, 2, 3, 1)).reshape(-1, C).astype(jnp.float32)
    lab = labels.reshape(-1).astype(jnp.int32)
    lse = jax.scipy.special.logsumexp(x, axis=-1)
    safe_lab = jnp.where(lab == ignore_lb, 0, lab)
    tgt = jnp.take_along_axis(x, safe_lab[:, None], axis=-1)[:, 0]
    loss = jnp.where(lab == ignore_lb, 0.0, lse - tgt)
    sorted_loss = jnp.sort(loss)[::-1]
    thresh_val = -jnp.log(jnp.asarray(thresh, dtype=jnp.float32))
    if float(sorted_loss[n_min]) > float(thresh_val):
        kept = loss[loss > thresh_val]
        return jnp.mean(kept)
    return jnp.mean(sorted_loss[:n_min])


if __name__ == "__main__":
    # Small shapes: batch=2, classes=4, spatial 16x16  ->  P = 512 pixels.
    N, C, H, W = 2, 4, 16, 16
    thresh = 0.7                      # module arg; kernel uses -log(thresh)
    n_min = (N * H * W) // 16         # typical OHEM setting -> 32
    ignore_lb = 255

    key = jax.random.PRNGKey(0)
    k_logits, k_labels, k_ignore = jax.random.split(key, 3)
    logits = jax.random.normal(k_logits, (N, C, H, W), dtype=jnp.float32)
    labels = jax.random.randint(k_labels, (N, H, W), 0, C, dtype=jnp.int32)
    # sprinkle some ignored pixels
    ignore_mask = jax.random.uniform(k_ignore, (N, H, W)) < 0.05
    labels = jnp.where(ignore_mask, jnp.int32(ignore_lb), labels)

    out = ohem_ce_loss(logits, labels, thresh, n_min, ignore_lb)
    out = jax.block_until_ready(out)

    ref = ohem_ce_loss_ref(logits, labels, thresh, n_min, ignore_lb)
    np.testing.assert_allclose(np.asarray(out), np.asarray(ref),
                               rtol=1e-4, atol=1e-5)
    print("KERNEL_OK")
</pallas_src>

<mosaic_0001>
module attributes {stable_mosaic.version = 11 : i64} {
  func.func @_ce_kernel(%arg0: i32, %arg1: i32, %arg2: memref<1x4x1x256xf32, #tpu.memory_space<vmem>>, %arg3: memref<1x1x256xi32, #tpu.memory_space<vmem>>, %arg4: memref<1x1x256xf32, #tpu.memory_space<vmem>>) attributes {dimension_semantics = [#tpu.dimension_semantics<parallel>, #tpu.dimension_semantics<parallel>], iteration_bounds = array<i64: 2, 1>, scalar_prefetch = 0 : i64, scratch_operands = 0 : i64, tpu.core_type = #tpu.core_type<tc>, window_params = [{transform_indices = @transform_0, window_bounds = array<i64: 1, 4, 1, 256>}, {transform_indices = @transform_1, window_bounds = array<i64: 1, 1, 256>}, {transform_indices = @transform_2, window_bounds = array<i64: 1, 1, 256>}]} {
    %c0 = arith.constant 0 : index
    %c0_0 = arith.constant 0 : index
    %c0_1 = arith.constant 0 : index
    %0 = vector.load %arg3[%c0, %c0_0, %c0_1] : memref<1x1x256xi32, #tpu.memory_space<vmem>>, vector<1x1x256xi32>
    %1 = vector.shape_cast %0 : vector<1x1x256xi32> to vector<1x256xi32>
    %c0_2 = arith.constant 0 : index
    %c0_3 = arith.constant 0 : index
    %c0_4 = arith.constant 0 : index
    %c0_5 = arith.constant 0 : index
    %2 = vector.load %arg2[%c0_2, %c0_3, %c0_4, %c0_5] : memref<1x4x1x256xf32, #tpu.memory_space<vmem>>, vector<1x1x1x256xf32>
    %3 = vector.shape_cast %2 : vector<1x1x1x256xf32> to vector<1x256xf32>
    %c0_6 = arith.constant 0 : index
    %c1 = arith.constant 1 : index
    %c0_7 = arith.constant 0 : index
    %c0_8 = arith.constant 0 : index
    %4 = vector.load %arg2[%c0_6, %c1, %c0_7, %c0_8] : memref<1x4x1x256xf32, #tpu.memory_space<vmem>>, vector<1x1x1x256xf32>
    %5 = vector.shape_cast %4 : vector<1x1x1x256xf32> to vector<1x256xf32>
    %6 = arith.maximumf %3, %5 : vector<1x256xf32>
    %c0_9 = arith.constant 0 : index
    %c2 = arith.constant 2 : index
    %c0_10 = arith.constant 0 : index
    %c0_11 = arith.constant 0 : index
    %7 = vector.load %arg2[%c0_9, %c2, %c0_10, %c0_11] : memref<1x4x1x256xf32, #tpu.memory_space<vmem>>, vector<1x1x1x256xf32>
    %8 = vector.shape_cast %7 : vector<1x1x1x256xf32> to vector<1x256xf32>
    %9 = arith.maximumf %6, %8 : vector<1x256xf32>
    %c0_12 = arith.constant 0 : index
    %c3 = arith.constant 3 : index
    %c0_13 = arith.constant 0 : index
    %c0_14 = arith.constant 0 : index
    %10 = vector.load %arg2[%c0_12, %c3, %c0_13, %c0_14] : memref<1x4x1x256xf32, #tpu.memory_space<vmem>>, vector<1x1x1x256xf32>
    %11 = vector.shape_cast %10 : vector<1x1x1x256xf32> to vector<1x256xf32>
    %12 = arith.maximumf %9, %11 : vector<1x256xf32>
    %cst = arith.constant 0.000000e+00 : f32
    %13 = vector.broadcast %cst : f32 to vector<1x256xf32>
    %cst_15 = arith.constant 0.000000e+00 : f32
    %14 = vector.broadcast %cst_15 : f32 to vector<1x256xf32>
    %c0_16 = arith.constant 0 : index
    %c0_17 = arith.constant 0 : index
    %c0_18 = arith.constant 0 : index
    %c0_19 = arith.constant 0 : index
    %15 = vector.load %arg2[%c0_16, %c0_17, %c0_18, %c0_19] : memref<1x4x1x256xf32, #tpu.memory_space<vmem>>, vector<1x1x1x256xf32>
    %16 = vector.shape_cast %15 : vector<1x1x1x256xf32> to vector<1x256xf32>
    %17 = arith.subf %16, %12 : vector<1x256xf32>
    %18 = math.exp %17 : vector<1x256xf32>
    %19 = arith.addf %13, %18 : vector<1x256xf32>
    %c0_i32 = arith.constant 0 : i32
    %20 = vector.broadcast %c0_i32 : i32 to vector<1x256xi32>
    %21 = arith.cmpi eq, %1, %20 : vector<1x256xi32>
    %22 = arith.select %21, %16, %14 : vector<1x256xi1>, vector<1x256xf32>
    %c0_20 = arith.constant 0 : index
    %c1_21 = arith.constant 1 : index
    %c0_22 = arith.constant 0 : index
    %c0_23 = arith.constant 0 : index
    %23 = vector.load %arg2[%c0_20, %c1_21, %c0_22, %c0_23] : memref<1x4x1x256xf32, #tpu.memory_space<vmem>>, vector<1x1x1x256xf32>
    %24 = vector.shape_cast %23 : vector<1x1x1x256xf32> to vector<1x256xf32>
    %25 = arith.subf %24, %12 : vector<1x256xf32>
    %26 = math.exp %25 : vector<1x256xf32>
    %27 = arith.addf %19, %26 : vector<1x256xf32>
    %c1_i32 = arith.constant 1 : i32
    %28 = vector.broadcast %c1_i32 : i32 to vector<1x256xi32>
    %29 = arith.cmpi eq, %1, %28 : vector<1x256xi32>
    %30 = arith.select %29, %24, %22 : vector<1x256xi1>, vector<1x256xf32>
    %c0_24 = arith.constant 0 : index
    %c2_25 = arith.constant 2 : index
    %c0_26 = arith.constant 0 : index
    %c0_27 = arith.constant 0 : index
    %31 = vector.load %arg2[%c0_24, %c2_25, %c0_26, %c0_27] : memref<1x4x1x256xf32, #tpu.memory_space<vmem>>, vector<1x1x1x256xf32>
    %32 = vector.shape_cast %31 : vector<1x1x1x256xf32> to vector<1x256xf32>
    %33 = arith.subf %32, %12 : vector<1x256xf32>
    %34 = math.exp %33 : vector<1x256xf32>
    %35 = arith.addf %27, %34 : vector<1x256xf32>
    %c2_i32 = arith.constant 2 : i32
    %36 = vector.broadcast %c2_i32 : i32 to vector<1x256xi32>
    %37 = arith.cmpi eq, %1, %36 : vector<1x256xi32>
    %38 = arith.select %37, %32, %30 : vector<1x256xi1>, vector<1x256xf32>
    %c0_28 = arith.constant 0 : index
    %c3_29 = arith.constant 3 : index
    %c0_30 = arith.constant 0 : index
    %c0_31 = arith.constant 0 : index
    %39 = vector.load %arg2[%c0_28, %c3_29, %c0_30, %c0_31] : memref<1x4x1x256xf32, #tpu.memory_space<vmem>>, vector<1x1x1x256xf32>
    %40 = vector.shape_cast %39 : vector<1x1x1x256xf32> to vector<1x256xf32>
    %41 = arith.subf %40, %12 : vector<1x256xf32>
    %42 = math.exp %41 : vector<1x256xf32>
    %43 = arith.addf %35, %42 : vector<1x256xf32>
    %c3_i32 = arith.constant 3 : i32
    %44 = vector.broadcast %c3_i32 : i32 to vector<1x256xi32>
    %45 = arith.cmpi eq, %1, %44 : vector<1x256xi32>
    %46 = arith.select %45, %40, %38 : vector<1x256xi1>, vector<1x256xf32>
    %47 = math.log %43 : vector<1x256xf32>
    %48 = arith.addf %12, %47 : vector<1x256xf32>
    %49 = arith.subf %48, %46 : vector<1x256xf32>
    %c255_i32 = arith.constant 255 : i32
    %50 = vector.broadcast %c255_i32 : i32 to vector<1x256xi32>
    %51 = arith.cmpi eq, %1, %50 : vector<1x256xi32>
    %cst_32 = arith.constant 0.000000e+00 : f32
    %52 = vector.broadcast %cst_32 : f32 to vector<1x256xf32>
    %53 = arith.select %51, %52, %49 : vector<1x256xi1>, vector<1x256xf32>
    %c0_33 = arith.constant 0 : index
    %c0_34 = arith.constant 0 : index
    %c0_35 = arith.constant 0 : index
    %54 = vector.load %arg4[%c0_33, %c0_34, %c0_35] : memref<1x1x256xf32, #tpu.memory_space<vmem>>, vector<1x1x256xf32>
    %55 = vector.shape_cast %54 : vector<1x1x256xf32> to vector<1x256xf32>
    %56 = vector.shape_cast %53 : vector<1x256xf32> to vector<1x1x256xf32>
    tpu.vector_store %arg4[%c0_33, %c0_34, %c0_35], %56 {strides = array<i32>} : memref<1x1x256xf32, #tpu.memory_space<vmem>>, vector<1x1x256xf32>,
    return
  }
  func.func @transform_0(%arg0: i32, %arg1: i32) -> (i32, i32, i32, i32) {
    %c0_i32 = arith.constant 0 : i32
    %c0_i32_0 = arith.constant 0 : i32
    %c0_i32_1 = arith.constant 0 : i32
    return %arg0, %c0_i32, %arg1, %c0_i32_0 : i32, i32, i32, i32
  }
  func.func @transform_1(%arg0: i32, %arg1: i32) -> (i32, i32, i32) {
    %c0_i32 = arith.constant 0 : i32
    %c0_i32_0 = arith.constant 0 : i32
    return %arg0, %arg1, %c0_i32 : i32, i32, i32
  }
  func.func @transform_2(%arg0: i32, %arg1: i32) -> (i32, i32, i32) {
    %c0_i32 = arith.constant 0 : i32
    %c0_i32_0 = arith.constant 0 : i32
    return %arg0, %arg1, %c0_i32 : i32, i32, i32
  }
}

</mosaic_0001>

<llo_original>
// kernel: tpu_custom_call.1
$region0: #{tpu_custom_call.1}
  #allocation0 [shape = 'u32[]', space=smem, size = 0x4, offset = 0x4, fixed_abs, tag = 'smem constant byte address 0x4 - core index']
  #allocation1 [shape = 'u32[144,128]{1,0:T(1,128)}', space=vmem, size = 0x12000, scoped, tag = 'internal scratch']
  %s0 = inlined_call_operand.hbm [shape: f32[2,4,1,256], index: 0, kind: input, shape index: {}]
  %s1 = inlined_call_operand.hbm [shape: s32[2,1,256], index: 1, kind: input, shape index: {}]
  %s2 = inlined_call_operand.hbm [shape: f32[2,1,256], index: 2, kind: output, shape index: {}]
  %s3 = sld [smem:[#allocation0]]
  $region49: #{tpu_custom_call.1} parent=0
    _
  %s5 = ssub.s32 1, %s3
  %s6 = scalar_select 0, %s5, %s3
  $region1: #{tpu_custom_call.1} parent=0
    #allocation2 [shape = 'u8[8192]{0}', space=vmem, size = 0x2000, scoped, tag = 'input window, operand 0']
    #allocation3 [shape = 's32[2]{0}', space=sflag, size = 0x8, scoped, tag = 'scoped memory for tpu_custom_call.1']
    #allocation4 [shape = 's32[2]{0}', space=sflag, size = 0x8, scoped, tag = 'scoped memory for tpu_custom_call.1']
    #allocation5 [shape = 'u8[2048]{0}', space=vmem, size = 0x800, scoped, tag = 'input window, operand 1']
    #allocation6 [shape = 's32[2]{0}', space=sflag, size = 0x8, scoped, tag = 'scoped memory for tpu_custom_call.1']
    #allocation7 [shape = 'u8[2048]{0}', space=vmem, size = 0x800, scoped, tag = 'output window, operand 0']
    %7 = vsyncpa [#allocation3], 0
    %s8 = scalar_lea.sflag [#allocation3], 1
    %9 = vsyncpa %s8, 0
    %10 = vsyncpa [#allocation6], 0
    %s11 = scalar_lea.sflag [#allocation6], 1
    %12 = vsyncpa %s11, 0
    %13 = vsyncpa [#allocation4], 0
    %s14 = scalar_lea.sflag [#allocation4], 1
    %15 = vsyncpa %s14, 0
    loop: start=0, step=1, limit=4
    $region2: #{tpu_custom_call.1} parent=1 // loop_pre_header
      _
    $region3: #{tpu_custom_call.1} parent=1 // loop_header
      %s17 = sphi 0, %s21
      %p18 = scmp.ge.s32.totalorder %s17, 4
      %s24 = sphi 0, %s36
      %s25 = sphi 0, %s32
      %s26 = sphi 0, %s24
      %s27 = sphi 0, %s25
      %s28 = sphi 0, %s26
      %s29 = sphi 0, %s27
      %s41 = sphi 0, %s43
      %s44 = sphi 0, %s41
      %s45 = sphi 0, %s44
      %s61 = sphi 0, %s45
      %s69 = sphi 0, %s71
      %s72 = sphi 0, %s69
      %s73 = sphi 0, %s72
      %s89 = sphi 0, %s73
      %s97 = sphi 0, %s99
      %s100 = sphi 0, %s97
      %s101 = sphi 0, %s100
      %s117 = sphi 0, %s101
    $region4: #{tpu_custom_call.1} parent=1 // loop_header_branch
      %20 = sbr.rel (%p18) target = $region8
    $region5: #{tpu_custom_call.1} parent=1 // loop_body
      %s22 = ssub.s32 %s17, 1
      %s23 = ssub.s32 %s17, 2
      %s30 = sadd.s32 1, %s25
      %p31 = scmp.ge.s32.totalorder %s30, 1
      %s32 = scalar_select %p31, 0, %s30
      %s33 = sadd.s32 1, %s24
      %s34 = scalar_select %p31, %s33, %s24
      %p35 = scmp.ge.s32.totalorder %s34, 2
      %s36 = scalar_select %p35, 0, %s34
      %s37 = ssub.s32 %s24, %s36
      %s38 = ssub.s32 %s25, %s32
      %s39 = sor.u32 %s37, %s38
      %p40 = scmp.eq.s32.totalorder %s39, 0
      %s42 = sadd.s32 %s41, 1
      %s43 = scalar_select %p40, %s41, %s42
      %p46 = pneg %p40
      %p47 = scmp.eq.s32.totalorder %s17, 1
      %p48 = por %p46, %p47
      %p49 = scmp.ne.s32.totalorder %s41, %s44
      %p50 = scmp.eq.s32.totalorder %s17, 0
      %p51 = por %p49, %p50
      %p52 = scmp.ne.s32.totalorder %s41, %s44
      %p53 = scmp.eq.s32.totalorder %s22, 1
      %p54 = por %p52, %p53
      %p55 = scmp.ne.s32.totalorder %s44, %s45
      %p56 = scmp.eq.s32.totalorder %s22, 0
      %p57 = por %p55, %p56
      %p58 = scmp.ne.s32.totalorder %s44, %s45
      %p59 = scmp.eq.s32.totalorder %s23, 1
      %p60 = por %p58, %p59
      %p62 = scmp.ne.s32.totalorder %s45, %s61
      %p63 = scmp.eq.s32.totalorder %s23, 0
      %p64 = por %p62, %p63
      %s65 = ssub.s32 %s24, %s36
      %s66 = ssub.s32 %s25, %s32
      %s67 = sor.u32 %s65, %s66
      %p68 = scmp.eq.s32.totalorder %s67, 0
      %s70 = sadd.s32 %s69, 1
      %s71 = scalar_select %p68, %s69, %s70
      %p74 = pneg %p68
      %p75 = scmp.eq.s32.totalorder %s17, 1
      %p76 = por %p74, %p75
      %p77 = scmp.ne.s32.totalorder %s69, %s72
      %p78 = scmp.eq.s32.totalorder %s17, 0
      %p79 = por %p77, %p78
      %p80 = scmp.ne.s32.totalorder %s69, %s72
      %p81 = scmp.eq.s32.totalorder %s22, 1
      %p82 = por %p80, %p81
      %p83 = scmp.ne.s32.totalorder %s72, %s73
      %p84 = scmp.eq.s32.totalorder %s22, 0
      %p85 = por %p83, %p84
      %p86 = scmp.ne.s32.totalorder %s72, %s73
      %p87 = scmp.eq.s32.totalorder %s23, 1
      %p88 = por %p86, %p87
      %p90 = scmp.ne.s32.totalorder %s73, %s89
      %p91 = scmp.eq.s32.totalorder %s23, 0
      %p92 = por %p90, %p91
      %s93 = ssub.s32 %s24, %s36
      %s94 = ssub.s32 %s25, %s32
      %s95 = sor.u32 %s93, %s94
      %p96 = scmp.eq.s32.totalorder %s95, 0
      %s98 = sadd.s32 %s97, 1
      %s99 = scalar_select %p96, %s97, %s98
      %p102 = pneg %p96
      %p103 = scmp.eq.s32.totalorder %s17, 1
      %p104 = por %p102, %p103
      %p105 = scmp.ne.s32.totalorder %s97, %s100
      %p106 = scmp.eq.s32.totalorder %s17, 0
      %p107 = por %p105, %p106
      %p108 = scmp.ne.s32.totalorder %s97, %s100
      %p109 = scmp.eq.s32.totalorder %s22, 1
      %p110 = por %p108, %p109
      %p111 = scmp.ne.s32.totalorder %s100, %s101
      %p112 = scmp.eq.s32.totalorder %s22, 0
      %p113 = por %p111, %p112
      %p114 = scmp.ne.s32.totalorder %s100, %s101
      %p115 = scmp.eq.s32.totalorder %s23, 1
      %p116 = por %p114, %p115
      %p118 = scmp.ne.s32.totalorder %s101, %s117
      %p119 = scmp.eq.s32.totalorder %s23, 0
      %p120 = por %p118, %p119
      %p121 = scmp.le.s32.totalorder 1, %s17
      %p122 = scmp.lt.s32.totalorder %s17, 3
      %p123 = pnand %p121, %p122
      %p124 = pneg %p123
      // Predicated region
      $region9: #{tpu_custom_call.1} parent=5 // pred_check
        _
      $region10: #{tpu_custom_call.1} parent=5 // pred_check_branch
        %126 = sbr.rel (%p123) target = $region12
      $region11: #{tpu_custom_call.1} parent=5 // pred_region
        %s127 = ssub.s32 %s17, 1
      $region12: #{tpu_custom_call.1} parent=5 // pred_fallthru
        _
      %p128 = scmp.lt.s32.totalorder %s17, 2
      // Predicated region
      $region13: #{tpu_custom_call.1} parent=5 // pred_check
        %p129 = pneg %p128
      $region14: #{tpu_custom_call.1} parent=5 // pred_check_branch
        %131 = sbr.rel (%p129) target = $region16
      $region15: #{tpu_custom_call.1} parent=5 // pred_region
        // Predicated region
        $region17: #{tpu_custom_call.1} parent=15 // pred_check
          %p132 = pneg %p51
        $region18: #{tpu_custom_call.1} parent=15 // pred_check_branch
          %134 = sbr.rel (%p132) target = $region20
        $region19: #{tpu_custom_call.1} parent=15 // pred_region
          %s135 = sand.u32 %s41, 1
          %s136 = scalar_lea.sflag [#allocation3], %s135
          %s137 = sand.u32 %s41, 1
          %s138 = smul.addr %s137, 8
          %s139 = scalar_lea.vmem [#allocation2], %s138
          %s141 = ssub.s32 128, 128
          %142 = vsyncadd %s136, %s141
          %s143 = smul.addr %s25, 2
          %s144 = smul.addr %s24, 8
          %s145 = sadd.s32 %s143, %s144
          %s146 = smul.addr %s145, 16
          %s147 = scalar_lea.hbm %s0, %s146
          %s148 = sshll.u32 %s139, 4
          %s149 = int_to_ptr.vmem [resolvable:$true] %s148
          %154 = dma.hbm_to_vmem [thread:$0]  %s147, 128, %s149, %s136, 32, 32, 2
        $region20: #{tpu_custom_call.1} parent=15 // pred_fallthru
          _
        // Predicated region
        $region21: #{tpu_custom_call.1} parent=15 // pred_check
          %p155 = pneg %p79
        $region22: #{tpu_custom_call.1} parent=15 // pred_check_branch
          %157 = sbr.rel (%p155) target = $region24
        $region23: #{tpu_custom_call.1} parent=15 // pred_region
          %s158 = sand.u32 %s69, 1
          %s159 = scalar_lea.sflag [#allocation6], %s158
          %s160 = sand.u32 %s69, 1
          %s161 = smul.addr %s160, 2
          %s162 = scalar_lea.vmem [#allocation5], %s161
          %s164 = ssub.s32 32, 32
          %165 = vsyncadd %s159, %s164
          %s166 = smul.addr %s25, 2
          %s167 = smul.addr %s24, 2
          %s168 = sadd.s32 %s166, %s167
          %s169 = smul.addr %s168, 16
          %s170 = scalar_lea.hbm %s1, %s169
          %s172 = sshll.u32 %s162, 4
          %s173 = int_to_ptr.vmem [resolvable:$true] %s172
          %175 = dma.hbm_to_vmem [thread:$0]  %s170, 32, %s173, %s159
        $region24: #{tpu_custom_call.1} parent=15 // pred_fallthru
          _
      $region16: #{tpu_custom_call.1} parent=5 // pred_fallthru
        _
      %p176 = scmp.le.s32.totalorder 1, %s17
      %p177 = scmp.lt.s32.totalorder %s17, 3
      %p178 = pnand %p176, %p177
      %p179 = pneg %p178
      // Predicated region
      $region25: #{tpu_custom_call.1} parent=5 // pred_check
        _
      $region26: #{tpu_custom_call.1} parent=5 // pred_check_branch
        %181 = sbr.rel (%p178) target = $region28
      $region27: #{tpu_custom_call.1} parent=5 // pred_region
        %s182 = ssub.s32 %s17, 1
        %s183 = sand.u32 %s44, 1
        %s184 = scalar_lea.sflag [#allocation3], %s183
        %s185 = sand.u32 %s44, 1
        %s186 = smul.addr %s185, 8
        %s187 = scalar_lea.vmem [#allocation2], %s186
        // Predicated region
        $region29: #{tpu_custom_call.1} parent=27 // pred_check
          %p188 = pneg %p57
        $region30: #{tpu_custom_call.1} parent=27 // pred_check_branch
          %190 = sbr.rel (%p188) target = $region32
        $region31: #{tpu_custom_call.1} parent=27 // pred_region
          %191 = dma.done %s184, 128
        $region32: #{tpu_custom_call.1} parent=27 // pred_fallthru
          _
        %s192 = sand.u32 %s72, 1
        %s193 = scalar_lea.sflag [#allocation6], %s192
        %s194 = sand.u32 %s72, 1
        %s195 = smul.addr %s194, 2
        %s196 = scalar_lea.vmem [#allocation5], %s195
        // Predicated region
        $region33: #{tpu_custom_call.1} parent=27 // pred_check
          %p197 = pneg %p85
        $region34: #{tpu_custom_call.1} parent=27 // pred_check_branch
          %199 = sbr.rel (%p197) target = $region36
        $region35: #{tpu_custom_call.1} parent=27 // pred_region
          %200 = dma.done %s193, 32
        $region36: #{tpu_custom_call.1} parent=27 // pred_fallthru
          _
        %s201 = sand.u32 %s44, 1
        %s202 = scalar_lea.sflag [#allocation3], %s201
        %s203 = sand.u32 %s44, 1
        %s204 = smul.addr %s203, 8
        %s205 = scalar_lea.vmem [#allocation2], %s204
        %p206 = pneg %p57
        %p207 = pneg %p54
        %s208 = sand.u32 %s72, 1
        %s209 = scalar_lea.sflag [#allocation6], %s208
        %s210 = sand.u32 %s72, 1
        %s211 = smul.addr %s210, 2
        %s212 = scalar_lea.vmem [#allocation5], %s211
        %p213 = pneg %p85
        %p214 = pneg %p82
        %p215 = pneg %p113
        %p216 = pneg %p110
        %s217 = sand.u32 %s100, 1
        %s218 = scalar_lea.sflag [#allocation4], %s217
        %s219 = sand.u32 %s100, 1
        %s220 = smul.addr %s219, 2
        %s221 = scalar_lea.vmem [#allocation7], %s220
        %v222 = vld [vmem:[%s196] sm:$0x3]
        %v223 = vld [vmem:[%s187] sm:$0x3]
        %s224 = scalar_lea.vmem %s187, 2 [#allocation2]
        %v225 = vld [vmem:[%s224] sm:$0x3]
        %v226 = vmax.f32 %v223, %v225
        %s227 = scalar_lea.vmem %s187, 4 [#allocation2]
        %v228 = vld [vmem:[%s227] sm:$0x3]
        %v229 = vmax.f32 %v226, %v228
        %s230 = scalar_lea.vmem %s187, 6 [#allocation2]
        %v231 = vld [vmem:[%s230] sm:$0x3]
        %v232 = vmax.f32 %v229, %v231
        %v233 = vsub.f32 %v223, %v232
        %v234 = vmul.f32 %v233, 1.442695
        %v235 = vpow.pop %v234
        %v236 = vadd.f32 %v235, 0.0
        %vm237 = vcmp.eq.s32.totalorder %v222, 0
        %v238 = vsel %vm237, %v223, 0.0
        %v239 = vsub.f32 %v225, %v232
        %v240 = vmul.f32 %v239, 1.442695
        %v241 = vpow.pop %v240
        %v242 = vadd.f32 %v236, %v241
        %vm243 = vcmp.eq.s32.totalorder %v222, 1
        %v244 = vsel %vm243, %v225, %v238
        %v245 = vsub.f32 %v228, %v232
        %v246 = vmul.f32 %v245, 1.442695
        %v247 = vpow.pop %v246
        %v248 = vadd.f32 %v242, %v247
        %vm249 = vcmp.eq.s32.totalorder %v222, 2
        %v250 = vsel %vm249, %v228, %v244
        %v251 = vsub.f32 %v231, %v232
        %v252 = vmul.f32 %v251, 1.442695
        %v253 = vpow.pop %v252
        %v254 = vadd.f32 %v248, %v253
        %vm255 = vcmp.eq.s32.totalorder %v222, 3
        %v256 = vsel %vm255, %v231, %v250
        %v257 = vlog2.pop %v254
        %v258 = vmul.f32 %v257, 0.6931472
        %v259 = vadd.f32 %v232, %v258
        %v260 = vsub.f32 %v259, %v256
        %vm261 = vcmp.eq.s32.totalorder %v222, 255
        %v262 = vsel %vm261, 0.0, %v260
        %v263 = vlaneseq
        %vm264 = vcmp.ge.s32.totalorder %v263, 0
        %vm265 = vcmp.lt.s32.totalorder %v263, 256
        %vm266 = vmand %vm264, %vm265
        %267 = vst.msk [vmem:[%s221] sm:$0x3] %vm266, %v262
        %s268 = sand.u32 %s100, 1
        %s269 = scalar_lea.sflag [#allocation4], %s268
        %s270 = sand.u32 %s100, 1
        %s271 = smul.addr %s270, 2
        %s272 = scalar_lea.vmem [#allocation7], %s271
        // Predicated region
        $region37: #{tpu_custom_call.1} parent=27 // pred_check
          %p273 = pneg %p110
        $region38: #{tpu_custom_call.1} parent=27 // pred_check_branch
          %275 = sbr.rel (%p273) target = $region40
        $region39: #{tpu_custom_call.1} parent=27 // pred_region
          %s277 = ssub.s32 32, 32
          %278 = vsyncadd %s269, %s277
          %s279 = smul.addr %s27, 2
          %s280 = smul.addr %s26, 2
          %s281 = sadd.s32 %s279, %s280
          %s282 = smul.addr %s281, 16
          %s283 = scalar_lea.hbm %s2, %s282
          %s285 = sshll.u32 %s272, 4
          %s286 = int_to_ptr.vmem [resolvable:$true] %s285
          %288 = dma.vmem_to_hbm [thread:$0]  %s286, 32, %s283, %s269
        $region40: #{tpu_custom_call.1} parent=27 // pred_fallthru
          _
      $region28: #{tpu_custom_call.1} parent=5 // pred_fallthru
        _
      %p289 = scmp.le.s32.totalorder 2, %s17
      // Predicated region
      $region41: #{tpu_custom_call.1} parent=5 // pred_check
        %p290 = pneg %p289
      $region42: #{tpu_custom_call.1} parent=5 // pred_check_branch
        %292 = sbr.rel (%p290) target = $region44
      $region43: #{tpu_custom_call.1} parent=5 // pred_region
        %s293 = ssub.s32 %s17, 2
        // Predicated region
        $region45: #{tpu_custom_call.1} parent=43 // pred_check
          %p294 = pneg %p116
        $region46: #{tpu_custom_call.1} parent=43 // pred_check_branch
          %296 = sbr.rel (%p294) target = $region48
        $region47: #{tpu_custom_call.1} parent=43 // pred_region
          %s297 = sand.u32 %s101, 1
          %s298 = scalar_lea.sflag [#allocation4], %s297
          %s299 = sand.u32 %s101, 1
          %s300 = smul.addr %s299, 2
          %s301 = scalar_lea.vmem [#allocation7], %s300
          %302 = dma.done %s298, 32
        $region48: #{tpu_custom_call.1} parent=43 // pred_fallthru
          _
      $region44: #{tpu_custom_call.1} parent=5 // pred_fallthru
        _
    $region6: #{tpu_custom_call.1} parent=1 // loop_footer
      %s21 = sadd.s32 1, %s17
    $region7: #{tpu_custom_call.1} parent=1 // loop_footer_branch
      %16 = sbr.rel target = $region3
    $region8: #{tpu_custom_call.1} parent=1 // loop_exit
      _
    %303 = vsyncpa [#allocation3], 1
    %s304 = scalar_lea.sflag [#allocation3], 1
    %305 = vsyncpa %s304, 1
    %306 = vsyncpa [#allocation6], 1
    %s307 = scalar_lea.sflag [#allocation6], 1
    %308 = vsyncpa %s307, 1
    %309 = vsyncpa [#allocation4], 1
    %s310 = scalar_lea.sflag [#allocation4], 1
    %311 = vsyncpa %s310, 1

</llo_original>
